<compile_context>
chip_gen: v7x
topology: tpu7x:2x2x1
jax: 0.10.0
libtpu: 0.0.40
codegen_flags: <defaults>
</compile_context>

<pallas_src>
from functools import partial

import jax
import jax.numpy as jnp
from jax.experimental import pallas as pl
from jax.experimental.pallas import tpu as pltpu

EPS = 1e-5
VMEM_LIMIT_BYTES = 48 * 1024 * 1024      # explicit scoped-VMEM limit (<= v7x physical 64 MiB)
DEFAULT_FUSED_BUDGET = 12 * 1024 * 1024  # per-step footprint target (safe on v5e/v6e/v7x)
MAX_SAMPLES_PER_STEP = 8                 # bound static unroll in the fused kernel


def _compiler_params(sem):
    return pltpu.CompilerParams(dimension_semantics=sem,
                                vmem_limit_bytes=VMEM_LIMIT_BYTES)


def _group_scale_shift(s, ss, gamma, beta, p, pt, inv_count):
    """Per-channel (C,1) scale/shift from per-channel sums s / ss (both (C,1)).

    p:  (C_out, G) one-hot channel->group broadcast matrix
    pt: (G, C_out) its transpose (group reduce matrix)
    """
    gs = jnp.dot(pt, s, preferred_element_type=jnp.float32)        # (G, 1)
    gss = jnp.dot(pt, ss, preferred_element_type=jnp.float32)      # (G, 1)
    mean_g = gs * inv_count
    # biased variance (matches torch GroupNorm); clamp guards f32 cancellation
    var_g = jnp.maximum(gss * inv_count - mean_g * mean_g, 0.0)
    inv_std_g = jax.lax.rsqrt(var_g + EPS)
    mean_c = jnp.dot(p, mean_g, preferred_element_type=jnp.float32)      # (C_out, 1)
    inv_std_c = jnp.dot(p, inv_std_g, preferred_element_type=jnp.float32)
    scale = inv_std_c * gamma                                            # (C_out, 1)
    shift = beta - mean_c * scale
    return scale, shift


def _fused_kernel(x_ref, w_ref, b_ref, gamma_ref, beta_ref, p_ref, pt_ref,
                  o_ref, *, inv_count):
    """Single pass: per sample, y = W @ x + b (MXU, HW in lanes), per-group
    stats, then ONE folded FMA over the big (C_out, HW) tensor."""
    for i in range(x_ref.shape[0]):                 # static unroll, small count
        x = x_ref[i]                                # (C_in, HW)
        y = jnp.dot(w_ref[...], x, preferred_element_type=jnp.float32) + b_ref[...]
        s = jnp.sum(y, axis=1, keepdims=True)       # (C_out, 1)
        ss = jnp.sum(y * y, axis=1, keepdims=True)  # (C_out, 1)
        scale, shift = _group_scale_shift(s, ss, gamma_ref[...], beta_ref[...],
                                          p_ref[...], pt_ref[...], inv_count)
        o_ref[i] = (y * scale + shift).astype(o_ref.dtype)


def _stats_kernel(x_ref, w_ref, b_ref, gamma_ref, beta_ref, p_ref, pt_ref,
                  y_ref, scale_ref, shift_ref, s_acc, ss_acc, *, inv_count):
    """Pass 1 (tiled): conv on one HW tile, write y, accumulate per-channel
    sums across tiles, finalize per-channel scale/shift at the last tile."""
    t = pl.program_id(1)

    @pl.when(t == 0)
    def _():
        s_acc[...] = jnp.zeros_like(s_acc)
        ss_acc[...] = jnp.zeros_like(ss_acc)

    y = jnp.dot(w_ref[...], x_ref[0], preferred_element_type=jnp.float32) + b_ref[...]
    y_ref[0] = y.astype(y_ref.dtype)
    s_acc[...] += jnp.sum(y, axis=1, keepdims=True)
    ss_acc[...] += jnp.sum(y * y, axis=1, keepdims=True)

    @pl.when(t == pl.num_programs(1) - 1)
    def _():
        scale, shift = _group_scale_shift(s_acc[...], ss_acc[...],
                                          gamma_ref[...], beta_ref[...],
                                          p_ref[...], pt_ref[...], inv_count)
        scale_ref[0] = scale
        shift_ref[0] = shift


def _apply_kernel(y_ref, scale_ref, shift_ref, o_ref):
    """Pass 2 (tiled): lane-dense FMA normalize, in place on the y buffer."""
    y = y_ref[0].astype(jnp.float32)
    o_ref[0] = (y * scale_ref[0] + shift_ref[0]).astype(o_ref.dtype)


def _pick_hw_tile(hw, per_hw_bytes, budget):
    """Largest multiple-of-128 divisor of hw whose per-step footprint fits."""
    n128 = hw // 128
    for d in range(n128, 0, -1):
        if n128 % d == 0 and d * 128 * per_hw_bytes <= budget:
            return d * 128
    return 128


def _pick_block_n(n, per_sample_bytes, budget):
    """Largest divisor of n (capped) whose fused per-step footprint fits."""
    best = 1
    for d in range(1, min(n, MAX_SAMPLES_PER_STEP) + 1):
        if n % d == 0 and d * per_sample_bytes <= budget:
            best = d
    return best


def conv1x1_groupnorm(x_nchw, w, b, gamma, beta, num_groups, *,
                      fused_budget_bytes=DEFAULT_FUSED_BUDGET):
    """1x1 Conv2d (with bias) + GroupNorm(affine), torch semantics.

    x_nchw: (N, C_in, H, W);  w: (C_out, C_in);  b/gamma/beta: (C_out,).
    """
    N, C_in, H, W_sp = x_nchw.shape
    C_out = w.shape[0]
    assert C_out % num_groups == 0
    HW = H * W_sp
    cg = C_out // num_groups
    inv_count = 1.0 / float(HW * cg)

    io_dtype = x_nchw.dtype
    isz = jnp.dtype(io_dtype).itemsize

    x = x_nchw.reshape(N, C_in, HW)                 # NCHW -> (N, C, HW), no transpose
    w_m = w.astype(io_dtype)                        # MXU operand dtype follows x
    b_c = b.reshape(C_out, 1).astype(jnp.float32)
    g_c = gamma.reshape(C_out, 1).astype(jnp.float32)
    be_c = beta.reshape(C_out, 1).astype(jnp.float32)
    gid = jnp.arange(C_out) // cg
    p = (gid[:, None] == jnp.arange(num_groups)[None, :]).astype(jnp.float32)  # (C_out, G)
    pt = jnp.transpose(p)                                                       # (G, C_out)

    # Per-HW-element per-step footprint: double-buffered x in + out, f32 y.
    fused_per_hw = 2 * C_in * isz + 2 * C_out * isz + 4 * C_out
    fused_per_sample = HW * fused_per_hw
    use_tiled = (fused_per_sample > fused_budget_bytes) and (HW % 128 == 0)

    small_specs = [
        pl.BlockSpec((C_out, C_in), lambda *a: (0, 0)),        # W
        pl.BlockSpec((C_out, 1), lambda *a: (0, 0)),           # bias
        pl.BlockSpec((C_out, 1), lambda *a: (0, 0)),           # gamma
        pl.BlockSpec((C_out, 1), lambda *a: (0, 0)),           # beta
        pl.BlockSpec((C_out, num_groups), lambda *a: (0, 0)),  # group broadcast
        pl.BlockSpec((num_groups, C_out), lambda *a: (0, 0)),  # group reduce
    ]

    if not use_tiled:
        # Fused single-pass path; batch several samples per grid step to
        # amortize the ~0.35us per-step overhead at small shapes.
        block_n = _pick_block_n(N, fused_per_sample,
                                max(fused_budget_bytes, fused_per_sample))
        out = pl.pallas_call(
            partial(_fused_kernel, inv_count=inv_count),
            out_shape=jax.ShapeDtypeStruct((N, C_out, HW), io_dtype),
            grid_spec=pltpu.PrefetchScalarGridSpec(
                num_scalar_prefetch=0,
                grid=(N // block_n,),
                in_specs=[pl.BlockSpec((block_n, C_in, HW), lambda n: (n, 0, 0))]
                         + small_specs,
                out_specs=pl.BlockSpec((block_n, C_out, HW), lambda n: (n, 0, 0)),
            ),
            compiler_params=_compiler_params(("parallel",)),
        )(x, w_m, b_c, g_c, be_c, p, pt)
    else:
        # Two-pass HW-tiled path for large feature maps.
        per_hw = max(2 * C_in * isz + 2 * C_out * isz + 4 * C_out,  # pass 1
                     4 * C_out * isz)                               # pass 2
        tile = _pick_hw_tile(HW, per_hw, fused_budget_bytes)
        T = HW // tile

        y, scale, shift = pl.pallas_call(
            partial(_stats_kernel, inv_count=inv_count),
            out_shape=(jax.ShapeDtypeStruct((N, C_out, HW), io_dtype),
                       jax.ShapeDtypeStruct((N, C_out, 1), jnp.float32),
                       jax.ShapeDtypeStruct((N, C_out, 1), jnp.float32)),
            grid_spec=pltpu.PrefetchScalarGridSpec(
                num_scalar_prefetch=0,
                grid=(N, T),
                in_specs=[pl.BlockSpec((1, C_in, tile), lambda n, t: (n, 0, t))]
                         + small_specs,
                out_specs=[pl.BlockSpec((1, C_out, tile), lambda n, t: (n, 0, t)),
                           pl.BlockSpec((1, C_out, 1), lambda n, t: (n, 0, 0)),
                           pl.BlockSpec((1, C_out, 1), lambda n, t: (n, 0, 0))],
                scratch_shapes=[pltpu.VMEM((C_out, 1), jnp.float32),
                                pltpu.VMEM((C_out, 1), jnp.float32)],
            ),
            compiler_params=_compiler_params(("parallel", "arbitrary")),
        )(x, w_m, b_c, g_c, be_c, p, pt)

        out = pl.pallas_call(
            _apply_kernel,
            out_shape=jax.ShapeDtypeStruct((N, C_out, HW), io_dtype),
            grid_spec=pltpu.PrefetchScalarGridSpec(
                num_scalar_prefetch=0,
                grid=(N, T),
                in_specs=[pl.BlockSpec((1, C_out, tile), lambda n, t: (n, 0, t)),
                          pl.BlockSpec((1, C_out, 1), lambda n, t: (n, 0, 0)),
                          pl.BlockSpec((1, C_out, 1), lambda n, t: (n, 0, 0))],
                out_specs=pl.BlockSpec((1, C_out, tile), lambda n, t: (n, 0, t)),
            ),
            compiler_params=_compiler_params(("parallel", "parallel")),
            input_output_aliases={0: 0},   # normalize y in place
        )(y, scale, shift)

    return out.reshape(N, C_out, H, W_sp)


class MultiProjectorPallas:
    """JAX/Pallas port of MultiProjector: one (1x1 conv -> GroupNorm) per input."""

    def __init__(self, in_channels, out_channels=None, *, key):
        out_channels = out_channels or in_channels[1]
        self.num_groups = min(in_channels)
        self.out_channels = out_channels
        self.params = []
        for i, c in enumerate(in_channels):
            k_w, k_b, k_g, k_be = jax.random.split(jax.random.fold_in(key, i), 4)
            w = jax.random.normal(k_w, (out_channels, c), jnp.float32) * 0.1
            b = jax.random.normal(k_b, (out_channels,), jnp.float32) * 0.05
            gamma = 1.0 + 0.1 * jax.random.normal(k_g, (out_channels,), jnp.float32)
            beta = 0.1 * jax.random.normal(k_be, (out_channels,), jnp.float32)
            self.params.append((w, b, gamma, beta))

    def __call__(self, xs, **kw):
        return [conv1x1_groupnorm(x, w, b, g, be, self.num_groups, **kw)
                for x, (w, b, g, be) in zip(xs, self.params)]


def _reference_proj(x, w, b, gamma, beta, num_groups):
    """Plain-JAX reference matching torch Conv2d(1x1) + GroupNorm semantics."""
    N, C_in, H, W_sp = x.shape
    C_out = w.shape[0]
    y = jnp.einsum('nchw,oc->nohw', x, w) + b[None, :, None, None]
    yg = y.reshape(N, num_groups, C_out // num_groups, H, W_sp)
    mean = yg.mean(axis=(2, 3, 4), keepdims=True)
    var = yg.var(axis=(2, 3, 4), keepdims=True)
    yn = ((yg - mean) / jnp.sqrt(var + EPS)).reshape(N, C_out, H, W_sp)
    return yn * gamma[None, :, None, None] + beta[None, :, None, None]


if __name__ == "__main__":
    key = jax.random.PRNGKey(0)

    def check(model, xs, outs, N, H, W_sp):
        for x, (w, b, g, be), o in zip(xs, model.params, outs):
            ref = _reference_proj(x, w, b, g, be, model.num_groups)
            assert o.shape == (N, model.out_channels, H, W_sp)
            assert jnp.allclose(o, ref, atol=1e-4, rtol=1e-4), \
                float(jnp.max(jnp.abs(o - ref)))

    N, H, W_sp = 2, 16, 16

    # 1) fused single-pass path (small feature maps)
    in_channels = [4, 8]   # -> out_channels = 8, num_groups = 4
    k0, k1, kp = jax.random.split(key, 3)
    xs = [jax.random.normal(k0, (N, in_channels[0], H, W_sp), jnp.float32),
          jax.random.normal(k1, (N, in_channels[1], H, W_sp), jnp.float32)]
    model = MultiProjectorPallas(in_channels, key=kp)
    outs = [jax.block_until_ready(o) for o in model(xs)]
    check(model, xs, outs, N, H, W_sp)

    # 2) force the HW-tiled two-pass path (budget=0 -> 128-wide HW tiles, T=2)
    in_channels2 = [8, 16]  # -> out_channels = 16, num_groups = 8
    k2, k3, kp2 = jax.random.split(jax.random.fold_in(key, 7), 3)
    xs2 = [jax.random.normal(k2, (N, in_channels2[0], H, W_sp), jnp.float32),
           jax.random.normal(k3, (N, in_channels2[1], H, W_sp), jnp.float32)]
    model2 = MultiProjectorPallas(in_channels2, key=kp2)
    outs2 = [jax.block_until_ready(o) for o in model2(xs2, fused_budget_bytes=0)]
    check(model2, xs2, outs2, N, H, W_sp)

    print("KERNEL_OK")
</pallas_src>

<mosaic_0001>
module attributes {stable_mosaic.version = 11 : i64} {
  func.func @_fused_kernel(%arg0: i32, %arg1: memref<2x4x256xf32, #tpu.memory_space<vmem>>, %arg2: memref<8x4xf32, #tpu.memory_space<vmem>>, %arg3: memref<8x1xf32, #tpu.memory_space<vmem>>, %arg4: memref<8x1xf32, #tpu.memory_space<vmem>>, %arg5: memref<8x1xf32, #tpu.memory_space<vmem>>, %arg6: memref<8x4xf32, #tpu.memory_space<vmem>>, %arg7: memref<4x8xf32, #tpu.memory_space<vmem>>, %arg8: memref<2x8x256xf32, #tpu.memory_space<vmem>>) attributes {dimension_semantics = [#tpu.dimension_semantics<parallel>], iteration_bounds = array<i64: 1>, scalar_prefetch = 0 : i64, scratch_operands = 0 : i64, tpu.core_type = #tpu.core_type<tc>, window_params = [{transform_indices = @transform_0, window_bounds = array<i64: 2, 4, 256>}, {pipeline_mode = #tpu.pipeline_mode<synchronous>, transform_indices = @transform_1, window_bounds = array<i64: 8, 4>}, {pipeline_mode = #tpu.pipeline_mode<synchronous>, transform_indices = @transform_2, window_bounds = array<i64: 8, 1>}, {pipeline_mode = #tpu.pipeline_mode<synchronous>, transform_indices = @transform_3, window_bounds = array<i64: 8, 1>}, {pipeline_mode = #tpu.pipeline_mode<synchronous>, transform_indices = @transform_4, window_bounds = array<i64: 8, 1>}, {pipeline_mode = #tpu.pipeline_mode<synchronous>, transform_indices = @transform_5, window_bounds = array<i64: 8, 4>}, {pipeline_mode = #tpu.pipeline_mode<synchronous>, transform_indices = @transform_6, window_bounds = array<i64: 4, 8>}, {transform_indices = @transform_7, window_bounds = array<i64: 2, 8, 256>}]} {
    %c0 = arith.constant 0 : index
    %c0_0 = arith.constant 0 : index
    %c0_1 = arith.constant 0 : index
    %0 = vector.load %arg1[%c0, %c0_0, %c0_1] : memref<2x4x256xf32, #tpu.memory_space<vmem>>, vector<1x4x256xf32>
    %1 = vector.shape_cast %0 : vector<1x4x256xf32> to vector<4x256xf32>
    %c0_2 = arith.constant 0 : index
    %c0_3 = arith.constant 0 : index
    %2 = vector.load %arg2[%c0_2, %c0_3] : memref<8x4xf32, #tpu.memory_space<vmem>>, vector<8x4xf32>
    %cst = arith.constant dense<0.000000e+00> : vector<8x256xf32>
    %3 = tpu.matmul %2, %1, %cst {dimension_numbers = #tpu.dot_dimension_numbers<[1], [0], [0], [1], [0, 0, 1, 1], [], []>} : vector<8x4xf32>, vector<4x256xf32>, vector<8x256xf32> -> vector<8x256xf32>
    %c0_4 = arith.constant 0 : index
    %c0_5 = arith.constant 0 : index
    %4 = vector.load %arg3[%c0_4, %c0_5] : memref<8x1xf32, #tpu.memory_space<vmem>>, vector<8x1xf32>
    %5 = vector.broadcast %4 : vector<8x1xf32> to vector<8x256xf32>
    %6 = arith.addf %3, %5 : vector<8x256xf32>
    %cst_6 = arith.constant dense<0.000000e+00> : vector<8xf32>
    %7 = vector.multi_reduction <add>, %6, %cst_6 [1] : vector<8x256xf32> to vector<8xf32>
    %8 = vector.shape_cast %7 : vector<8xf32> to vector<8x1xf32>
    %9 = arith.mulf %6, %6 : vector<8x256xf32>
    %cst_7 = arith.constant dense<0.000000e+00> : vector<8xf32>
    %10 = vector.multi_reduction <add>, %9, %cst_7 [1] : vector<8x256xf32> to vector<8xf32>
    %11 = vector.shape_cast %10 : vector<8xf32> to vector<8x1xf32>
    %c0_8 = arith.constant 0 : index
    %c0_9 = arith.constant 0 : index
    %12 = vector.load %arg4[%c0_8, %c0_9] : memref<8x1xf32, #tpu.memory_space<vmem>>, vector<8x1xf32>
    %c0_10 = arith.constant 0 : index
    %c0_11 = arith.constant 0 : index
    %13 = vector.load %arg5[%c0_10, %c0_11] : memref<8x1xf32, #tpu.memory_space<vmem>>, vector<8x1xf32>
    %c0_12 = arith.constant 0 : index
    %c0_13 = arith.constant 0 : index
    %14 = vector.load %arg6[%c0_12, %c0_13] : memref<8x4xf32, #tpu.memory_space<vmem>>, vector<8x4xf32>
    %c0_14 = arith.constant 0 : index
    %c0_15 = arith.constant 0 : index
    %15 = vector.load %arg7[%c0_14, %c0_15] : memref<4x8xf32, #tpu.memory_space<vmem>>, vector<4x8xf32>
    %cst_16 = arith.constant dense<0.000000e+00> : vector<4x1xf32>
    %16 = tpu.matmul %15, %8, %cst_16 {dimension_numbers = #tpu.dot_dimension_numbers<[1], [0], [0], [1], [0, 0, 1, 1], [], []>} : vector<4x8xf32>, vector<8x1xf32>, vector<4x1xf32> -> vector<4x1xf32>
    %cst_17 = arith.constant dense<0.000000e+00> : vector<4x1xf32>
    %17 = tpu.matmul %15, %11, %cst_17 {dimension_numbers = #tpu.dot_dimension_numbers<[1], [0], [0], [1], [0, 0, 1, 1], [], []>} : vector<4x8xf32>, vector<8x1xf32>, vector<4x1xf32> -> vector<4x1xf32>
    %cst_18 = arith.constant 0.001953125 : f32
    %18 = vector.broadcast %cst_18 : f32 to vector<4x1xf32>
    %19 = arith.mulf %16, %18 : vector<4x1xf32>
    %cst_19 = arith.constant 0.001953125 : f32
    %20 = vector.broadcast %cst_19 : f32 to vector<4x1xf32>
    %21 = arith.mulf %17, %20 : vector<4x1xf32>
    %22 = arith.mulf %19, %19 : vector<4x1xf32>
    %23 = arith.subf %21, %22 : vector<4x1xf32>
    %cst_20 = arith.constant 0.000000e+00 : f32
    %24 = vector.broadcast %cst_20 : f32 to vector<4x1xf32>
    %25 = arith.maximumf %23, %24 : vector<4x1xf32>
    %cst_21 = arith.constant 9.99999974E-6 : f32
    %26 = vector.broadcast %cst_21 : f32 to vector<4x1xf32>
    %27 = arith.addf %25, %26 : vector<4x1xf32>
    %28 = math.rsqrt %27 : vector<4x1xf32>
    %cst_22 = arith.constant dense<0.000000e+00> : vector<8x1xf32>
    %29 = tpu.matmul %14, %19, %cst_22 {dimension_numbers = #tpu.dot_dimension_numbers<[1], [0], [0], [1], [0, 0, 1, 1], [], []>} : vector<8x4xf32>, vector<4x1xf32>, vector<8x1xf32> -> vector<8x1xf32>
    %cst_23 = arith.constant dense<0.000000e+00> : vector<8x1xf32>
    %30 = tpu.matmul %14, %28, %cst_23 {dimension_numbers = #tpu.dot_dimension_numbers<[1], [0], [0], [1], [0, 0, 1, 1], [], []>} : vector<8x4xf32>, vector<4x1xf32>, vector<8x1xf32> -> vector<8x1xf32>
    %31 = arith.mulf %30, %12 : vector<8x1xf32>
    %32 = arith.mulf %29, %31 : vector<8x1xf32>
    %33 = arith.subf %13, %32 : vector<8x1xf32>
    %34 = vector.broadcast %31 : vector<8x1xf32> to vector<8x256xf32>
    %35 = arith.mulf %6, %34 : vector<8x256xf32>
    %36 = vector.broadcast %33 : vector<8x1xf32> to vector<8x256xf32>
    %37 = arith.addf %35, %36 : vector<8x256xf32>
    %c0_24 = arith.constant 0 : index
    %c0_25 = arith.constant 0 : index
    %c0_26 = arith.constant 0 : index
    %38 = vector.load %arg8[%c0_24, %c0_25, %c0_26] : memref<2x8x256xf32, #tpu.memory_space<vmem>>, vector<1x8x256xf32>
    %39 = vector.shape_cast %38 : vector<1x8x256xf32> to vector<8x256xf32>
    %40 = vector.shape_cast %37 : vector<8x256xf32> to vector<1x8x256xf32>
    tpu.vector_store %arg8[%c0_24, %c0_25, %c0_26], %40 {strides = array<i32>} : memref<2x8x256xf32, #tpu.memory_space<vmem>>, vector<1x8x256xf32>,
    %c1 = arith.constant 1 : index
    %c0_27 = arith.constant 0 : index
    %c0_28 = arith.constant 0 : index
    %41 = vector.load %arg1[%c1, %c0_27, %c0_28] : memref<2x4x256xf32, #tpu.memory_space<vmem>>, vector<1x4x256xf32>
    %42 = vector.shape_cast %41 : vector<1x4x256xf32> to vector<4x256xf32>
    %c0_29 = arith.constant 0 : index
    %c0_30 = arith.constant 0 : index
    %43 = vector.load %arg2[%c0_29, %c0_30] : memref<8x4xf32, #tpu.memory_space<vmem>>, vector<8x4xf32>
    %cst_31 = arith.constant dense<0.000000e+00> : vector<8x256xf32>
    %44 = tpu.matmul %43, %42, %cst_31 {dimension_numbers = #tpu.dot_dimension_numbers<[1], [0], [0], [1], [0, 0, 1, 1], [], []>} : vector<8x4xf32>, vector<4x256xf32>, vector<8x256xf32> -> vector<8x256xf32>
    %c0_32 = arith.constant 0 : index
    %c0_33 = arith.constant 0 : index
    %45 = vector.load %arg3[%c0_32, %c0_33] : memref<8x1xf32, #tpu.memory_space<vmem>>, vector<8x1xf32>
    %46 = vector.broadcast %45 : vector<8x1xf32> to vector<8x256xf32>
    %47 = arith.addf %44, %46 : vector<8x256xf32>
    %cst_34 = arith.constant dense<0.000000e+00> : vector<8xf32>
    %48 = vector.multi_reduction <add>, %47, %cst_34 [1] : vector<8x256xf32> to vector<8xf32>
    %49 = vector.shape_cast %48 : vector<8xf32> to vector<8x1xf32>
    %50 = arith.mulf %47, %47 : vector<8x256xf32>
    %cst_35 = arith.constant dense<0.000000e+00> : vector<8xf32>
    %51 = vector.multi_reduction <add>, %50, %cst_35 [1] : vector<8x256xf32> to vector<8xf32>
    %52 = vector.shape_cast %51 : vector<8xf32> to vector<8x1xf32>
    %c0_36 = arith.constant 0 : index
    %c0_37 = arith.constant 0 : index
    %53 = vector.load %arg4[%c0_36, %c0_37] : memref<8x1xf32, #tpu.memory_space<vmem>>, vector<8x1xf32>
    %c0_38 = arith.constant 0 : index
    %c0_39 = arith.constant 0 : index
    %54 = vector.load %arg5[%c0_38, %c0_39] : memref<8x1xf32, #tpu.memory_space<vmem>>, vector<8x1xf32>
    %c0_40 = arith.constant 0 : index
    %c0_41 = arith.constant 0 : index
    %55 = vector.load %arg6[%c0_40, %c0_41] : memref<8x4xf32, #tpu.memory_space<vmem>>, vector<8x4xf32>
    %c0_42 = arith.constant 0 : index
    %c0_43 = arith.constant 0 : index
    %56 = vector.load %arg7[%c0_42, %c0_43] : memref<4x8xf32, #tpu.memory_space<vmem>>, vector<4x8xf32>
    %cst_44 = arith.constant dense<0.000000e+00> : vector<4x1xf32>
    %57 = tpu.matmul %56, %49, %cst_44 {dimension_numbers = #tpu.dot_dimension_numbers<[1], [0], [0], [1], [0, 0, 1, 1], [], []>} : vector<4x8xf32>, vector<8x1xf32>, vector<4x1xf32> -> vector<4x1xf32>
    %cst_45 = arith.constant dense<0.000000e+00> : vector<4x1xf32>
    %58 = tpu.matmul %56, %52, %cst_45 {dimension_numbers = #tpu.dot_dimension_numbers<[1], [0], [0], [1], [0, 0, 1, 1], [], []>} : vector<4x8xf32>, vector<8x1xf32>, vector<4x1xf32> -> vector<4x1xf32>
    %cst_46 = arith.constant 0.001953125 : f32
    %59 = vector.broadcast %cst_46 : f32 to vector<4x1xf32>
    %60 = arith.mulf %57, %59 : vector<4x1xf32>
    %cst_47 = arith.constant 0.001953125 : f32
    %61 = vector.broadcast %cst_47 : f32 to vector<4x1xf32>
    %62 = arith.mulf %58, %61 : vector<4x1xf32>
    %63 = arith.mulf %60, %60 : vector<4x1xf32>
    %64 = arith.subf %62, %63 : vector<4x1xf32>
    %cst_48 = arith.constant 0.000000e+00 : f32
    %65 = vector.broadcast %cst_48 : f32 to vector<4x1xf32>
    %66 = arith.maximumf %64, %65 : vector<4x1xf32>
    %cst_49 = arith.constant 9.99999974E-6 : f32
    %67 = vector.broadcast %cst_49 : f32 to vector<4x1xf32>
    %68 = arith.addf %66, %67 : vector<4x1xf32>
    %69 = math.rsqrt %68 : vector<4x1xf32>
    %cst_50 = arith.constant dense<0.000000e+00> : vector<8x1xf32>
    %70 = tpu.matmul %55, %60, %cst_50 {dimension_numbers = #tpu.dot_dimension_numbers<[1], [0], [0], [1], [0, 0, 1, 1], [], []>} : vector<8x4xf32>, vector<4x1xf32>, vector<8x1xf32> -> vector<8x1xf32>
    %cst_51 = arith.constant dense<0.000000e+00> : vector<8x1xf32>
    %71 = tpu.matmul %55, %69, %cst_51 {dimension_numbers = #tpu.dot_dimension_numbers<[1], [0], [0], [1], [0, 0, 1, 1], [], []>} : vector<8x4xf32>, vector<4x1xf32>, vector<8x1xf32> -> vector<8x1xf32>
    %72 = arith.mulf %71, %53 : vector<8x1xf32>
    %73 = arith.mulf %70, %72 : vector<8x1xf32>
    %74 = arith.subf %54, %73 : vector<8x1xf32>
    %75 = vector.broadcast %72 : vector<8x1xf32> to vector<8x256xf32>
    %76 = arith.mulf %47, %75 : vector<8x256xf32>
    %77 = vector.broadcast %74 : vector<8x1xf32> to vector<8x256xf32>
    %78 = arith.addf %76, %77 : vector<8x256xf32>
    %c1_52 = arith.constant 1 : index
    %c0_53 = arith.constant 0 : index
    %c0_54 = arith.constant 0 : index
    %79 = vector.load %arg8[%c1_52, %c0_53, %c0_54] : memref<2x8x256xf32, #tpu.memory_space<vmem>>, vector<1x8x256xf32>
    %80 = vector.shape_cast %79 : vector<1x8x256xf32> to vector<8x256xf32>
    %81 = vector.shape_cast %78 : vector<8x256xf32> to vector<1x8x256xf32>
    tpu.vector_store %arg8[%c1_52, %c0_53, %c0_54], %81 {strides = array<i32>} : memref<2x8x256xf32, #tpu.memory_space<vmem>>, vector<1x8x256xf32>,
    return
  }
  func.func @transform_0(%arg0: i32) -> (i32, i32, i32) {
    %c0_i32 = arith.constant 0 : i32
    %c0_i32_0 = arith.constant 0 : i32
    %c0_i32_1 = arith.constant 0 : i32
    return %arg0, %c0_i32, %c0_i32_0 : i32, i32, i32
  }
  func.func @transform_1(%arg0: i32) -> (i32, i32) {
    %c0_i32 = arith.constant 0 : i32
    %c0_i32_0 = arith.constant 0 : i32
    %c0_i32_1 = arith.constant 0 : i32
    return %c0_i32, %c0_i32_0 : i32, i32
  }
  func.func @transform_2(%arg0: i32) -> (i32, i32) {
    %c0_i32 = arith.constant 0 : i32
    %c0_i32_0 = arith.constant 0 : i32
    %c0_i32_1 = arith.constant 0 : i32
    return %c0_i32, %c0_i32_0 : i32, i32
  }
  func.func @transform_3(%arg0: i32) -> (i32, i32) {
    %c0_i32 = arith.constant 0 : i32
    %c0_i32_0 = arith.constant 0 : i32
    %c0_i32_1 = arith.constant 0 : i32
    return %c0_i32, %c0_i32_0 : i32, i32
  }
  func.func @transform_4(%arg0: i32) -> (i32, i32) {
    %c0_i32 = arith.constant 0 : i32
    %c0_i32_0 = arith.constant 0 : i32
    %c0_i32_1 = arith.constant 0 : i32
    return %c0_i32, %c0_i32_0 : i32, i32
  }
  func.func @transform_5(%arg0: i32) -> (i32, i32) {
    %c0_i32 = arith.constant 0 : i32
    %c0_i32_0 = arith.constant 0 : i32
    %c0_i32_1 = arith.constant 0 : i32
    return %c0_i32, %c0_i32_0 : i32, i32
  }
  func.func @transform_6(%arg0: i32) -> (i32, i32) {
    %c0_i32 = arith.constant 0 : i32
    %c0_i32_0 = arith.constant 0 : i32
    %c0_i32_1 = arith.constant 0 : i32
    return %c0_i32, %c0_i32_0 : i32, i32
  }
  func.func @transform_7(%arg0: i32) -> (i32, i32, i32) {
    %c0_i32 = arith.constant 0 : i32
    %c0_i32_0 = arith.constant 0 : i32
    %c0_i32_1 = arith.constant 0 : i32
    return %arg0, %c0_i32, %c0_i32_0 : i32, i32, i32
  }
}

</mosaic_0001>

<llo_original>
// kernel: tpu_custom_call.1
$region0: #{tpu_custom_call.1}
  #allocation0 [shape = 'u32[]', space=smem, size = 0x4, offset = 0x4, fixed_abs, tag = 'smem constant byte address 0x4 - core index']
  #allocation1 [shape = 'u32[144,128]{1,0:T(1,128)}', space=vmem, size = 0x12000, scoped, tag = 'internal scratch']
  %s0 = inlined_call_operand.vmem [shape: f32[2,4,256], index: 0, kind: input, shape index: {}]
  %s1 = inlined_call_operand.vmem [shape: f32[8,4], index: 1, kind: input, shape index: {}]
  %s2 = inlined_call_operand.vmem [shape: f32[8,1], index: 2, kind: input, shape index: {}]
  %s3 = inlined_call_operand.vmem [shape: f32[8,1], index: 3, kind: input, shape index: {}]
  %s4 = inlined_call_operand.vmem [shape: f32[8,1], index: 4, kind: input, shape index: {}]
  %s5 = inlined_call_operand.vmem [shape: f32[8,4], index: 5, kind: input, shape index: {}]
  %s6 = inlined_call_operand.vmem [shape: f32[4,8], index: 6, kind: input, shape index: {}]
  %s7 = inlined_call_operand.hbm [shape: f32[2,8,256], index: 7, kind: output, shape index: {}]
  %s8 = sld [smem:[#allocation0]]
  $region38: #{tpu_custom_call.1} parent=0
    _
  %s10 = ssub.s32 1, %s8
  %s11 = scalar_select 0, %s10, %s8
  $region1: #{tpu_custom_call.1} parent=0
    #allocation2 [shape = 'u8[16384]{0}', space=vmem, size = 0x4000, scoped, tag = 'output window, operand 0, single buffered']
    #allocation3 [shape = 's32[1]{0}', space=sflag, size = 0x4, scoped, tag = 'scoped memory for tpu_custom_call.1']
    %12 = vsyncpa [#allocation3], 0
    // Predicated region
    $region2: #{tpu_custom_call.1} parent=1 // pred_check
      _
    $region3: #{tpu_custom_call.1} parent=1 // pred_check_branch
      %14 = sbr.rel (0) target = $region5
    $region4: #{tpu_custom_call.1} parent=1 // pred_region
      _
    $region5: #{tpu_custom_call.1} parent=1 // pred_fallthru
      _
    // Predicated region
    $region6: #{tpu_custom_call.1} parent=1 // pred_check
      _
    $region7: #{tpu_custom_call.1} parent=1 // pred_check_branch
      %16 = sbr.rel (0) target = $region9
    $region8: #{tpu_custom_call.1} parent=1 // pred_region
      _
    $region9: #{tpu_custom_call.1} parent=1 // pred_fallthru
      _
    // Predicated region
    $region10: #{tpu_custom_call.1} parent=1 // pred_check
      _
    $region11: #{tpu_custom_call.1} parent=1 // pred_check_branch
      %18 = sbr.rel (0) target = $region13
    $region12: #{tpu_custom_call.1} parent=1 // pred_region
      _
    $region13: #{tpu_custom_call.1} parent=1 // pred_fallthru
      _
    // Predicated region
    $region14: #{tpu_custom_call.1} parent=1 // pred_check
      _
    $region15: #{tpu_custom_call.1} parent=1 // pred_check_branch
      %20 = sbr.rel (0) target = $region17
    $region16: #{tpu_custom_call.1} parent=1 // pred_region
      _
    $region17: #{tpu_custom_call.1} parent=1 // pred_fallthru
      _
    // Predicated region
    $region18: #{tpu_custom_call.1} parent=1 // pred_check
      _
    $region19: #{tpu_custom_call.1} parent=1 // pred_check_branch
      %22 = sbr.rel (0) target = $region21
    $region20: #{tpu_custom_call.1} parent=1 // pred_region
      _
    $region21: #{tpu_custom_call.1} parent=1 // pred_fallthru
      _
    // Predicated region
    $region22: #{tpu_custom_call.1} parent=1 // pred_check
      _
    $region23: #{tpu_custom_call.1} parent=1 // pred_check_branch
      %24 = sbr.rel (0) target = $region25
    $region24: #{tpu_custom_call.1} parent=1 // pred_region
      _
    $region25: #{tpu_custom_call.1} parent=1 // pred_fallthru
      _
    // Predicated region
    $region26: #{tpu_custom_call.1} parent=1 // pred_check
      _
    $region27: #{tpu_custom_call.1} parent=1 // pred_check_branch
      %26 = sbr.rel (0) target = $region29
    $region28: #{tpu_custom_call.1} parent=1 // pred_region
      _
    $region29: #{tpu_custom_call.1} parent=1 // pred_fallthru
      _
    %v27 = vld [vmem:[%s0] sm:$0xff]
    %v28 = vld [vmem:[%s1] sm:$0xff]
    %v29 = vld [vmem:[%s2] sm:$0xff]
    %31 = vset.pattern.permute.xlu0 0
    %32 = vperm.xlu0 %31, %v29
    %v33 = vpop.permute.xlu0 %32
    %v36 = vcombine.high %v27, %v27
    %vm37 = vcmask 31744
    %v39 = vsel %vm37, %v28, 0
    %vm41 = vcmask 1043456
    %v42 = vsel %vm41, %v27, 0
    %v44 = vsel %vm41, %v36, 0
    %46 = vmatprep.subr.mxu0 %v44
    %47 = vmatpush1.msra.mxu0 %v42
    %48 = vmatprep.subr.mxu0 0.0
    %49 = vmatpush1.msra.mxu0 0.0
    %50 = vmatprep.subr.mxu0 0.0
    %51 = vmatpush1.msra.mxu0 0.0
    %52 = vmatprep.subr.mxu0 0.0
    %53 = vmatpush1.msra.mxu0 0.0
    %54 = vmatprep.subr.mxu0 0.0
    %55 = vmatpush1.msra.mxu0 0.0
    %56 = vmatprep.subr.mxu0 0.0
    %57 = vmatpush1.msra.mxu0 0.0
    %58 = vmatprep.subr.mxu0 0.0
    %59 = vmatpush1.msra.mxu0 0.0
    %60 = vmatprep.subr.mxu0 0.0
    %61 = vmatpush1.msra.mxu0 0.0
    %62 = vmatprep.subr.mxu0 0.0
    %63 = vmatpush1.msra.mxu0 0.0
    %64 = vmatprep.subr.mxu0 0.0
    %65 = vmatpush1.msra.mxu0 0.0
    %66 = vmatprep.subr.mxu0 0.0
    %67 = vmatpush1.msra.mxu0 0.0
    %68 = vmatprep.subr.mxu0 0.0
    %69 = vmatpush1.msra.mxu0 0.0
    %70 = vmatprep.subr.mxu0 0.0
    %71 = vmatpush1.msra.mxu0 0.0
    %72 = vmatprep.subr.mxu0 0.0
    %73 = vmatpush1.msra.mxu0 0.0
    %74 = vmatprep.subr.mxu0 0.0
    %75 = vmatpush1.msra.mxu0 0.0
    %76 = vmatprep.subr.mxu0 0.0
    %77 = vmatpush1.msra.mxu0 0.0
    %78 = vmatprep.subr.mxu0 0.0
    %79 = vmatpush1.msra.mxu0 0.0
    %80 = vmatprep.subr.mxu0 0.0
    %81 = vmatpush1.msra.mxu0 0.0
    %82 = vmatprep.subr.mxu0 0.0
    %83 = vmatpush1.msra.mxu0 0.0
    %84 = vmatprep.subr.mxu0 0.0
    %85 = vmatpush1.msra.mxu0 0.0
    %86 = vmatprep.subr.mxu0 0.0
    %87 = vmatpush1.msra.mxu0 0.0
    %88 = vmatprep.subr.mxu0 0.0
    %89 = vmatpush1.msra.mxu0 0.0
    %90 = vmatprep.subr.mxu0 0.0
    %91 = vmatpush1.msra.mxu0 0.0
    %92 = vmatprep.subr.mxu0 0.0
    %93 = vmatpush1.msra.mxu0 0.0
    %94 = vmatprep.subr.mxu0 0.0
    %95 = vmatpush1.msra.mxu0 0.0
    %96 = vmatprep.subr.mxu0 0.0
    %97 = vmatpush1.msra.mxu0 0.0
    %98 = vmatprep.subr.mxu0 0.0
    %99 = vmatpush1.msra.mxu0 0.0
    %100 = vmatprep.subr.mxu0 0.0
    %101 = vmatpush1.msra.mxu0 0.0
    %102 = vmatprep.subr.mxu0 0.0
    %103 = vmatpush1.msra.mxu0 0.0
    %104 = vmatprep.subr.mxu0 0.0
    %105 = vmatpush1.msra.mxu0 0.0
    %106 = vmatprep.subr.mxu0 0.0
    %107 = vmatpush1.msra.mxu0 0.0
    %108 = vmatprep.subr.mxu0 0.0
    %109 = vmatpush1.msra.mxu0 0.0
    %110 = vmatprep.mubr.f32.mxu0 0.0
    %111 = vmatmul.mubr.f32.gmra.mrb[0].mxu0 %v39
    %v112 = vpop.f32.mrb[0].mxu0
    %v113 = vadd.f32 %v33, %v112
    %v114 = vpop.f32.mrb[0].mxu0
    %v115 = vadd.f32 %v33, %v114
    %116 = vdwg.mxu0
    %v117 = vadd.f32 %v113, %v115
    %118 = vadd.xlane.f32.xlu0 %v117
    %v119 = vpop.xlane.xlu0 %118
    %v120 = vmul.f32 %v113, %v113
    %v121 = vmul.f32 %v115, %v115
    %v122 = vadd.f32 %v120, %v121
    %123 = vadd.xlane.f32.xlu0 %v122
    %v124 = vpop.xlane.xlu0 %123
    %v125 = vld [vmem:[%s3] sm:$0xff]
    %v126 = vld [vmem:[%s4] sm:$0xff]
    %v127 = vld [vmem:[%s5] sm:$0xff]
    %v128 = vld [vmem:[%s6] sm:$0xf]
    %vm129 = vcmask 64512
    %v131 = vsel %vm129, %v128, 0
    %133 = vmatprep.subr.mxu0 0.0
    %134 = vmatpush1.msra.mxu0 %v119
    %135 = vmatprep.subr.mxu0 0.0
    %136 = vmatpush1.msra.mxu0 0.0
    %137 = vmatprep.subr.mxu0 0.0
    %138 = vmatpush1.msra.mxu0 0.0
    %139 = vmatprep.subr.mxu0 0.0
    %140 = vmatpush1.msra.mxu0 0.0
    %141 = vmatprep.subr.mxu0 0.0
    %142 = vmatpush1.msra.mxu0 0.0
    %143 = vmatprep.subr.mxu0 0.0
    %144 = vmatpush1.msra.mxu0 0.0
    %145 = vmatprep.subr.mxu0 0.0
    %146 = vmatpush1.msra.mxu0 0.0
    %147 = vmatprep.subr.mxu0 0.0
    %148 = vmatpush1.msra.mxu0 0.0
    %149 = vmatprep.subr.mxu0 0.0
    %150 = vmatpush1.msra.mxu0 0.0
    %151 = vmatprep.subr.mxu0 0.0
    %152 = vmatpush1.msra.mxu0 0.0
    %153 = vmatprep.subr.mxu0 0.0
    %154 = vmatpush1.msra.mxu0 0.0
    %155 = vmatprep.subr.mxu0 0.0
    %156 = vmatpush1.msra.mxu0 0.0
    %157 = vmatprep.subr.mxu0 0.0
    %158 = vmatpush1.msra.mxu0 0.0
    %159 = vmatprep.subr.mxu0 0.0
    %160 = vmatpush1.msra.mxu0 0.0
    %161 = vmatprep.subr.mxu0 0.0
    %162 = vmatpush1.msra.mxu0 0.0
    %163 = vmatprep.subr.mxu0 0.0
    %164 = vmatpush1.msra.mxu0 0.0
    %165 = vmatprep.subr.mxu0 0.0
    %166 = vmatpush1.msra.mxu0 0.0
    %167 = vmatprep.subr.mxu0 0.0
    %168 = vmatpush1.msra.mxu0 0.0
    %169 = vmatprep.subr.mxu0 0.0
    %170 = vmatpush1.msra.mxu0 0.0
    %171 = vmatprep.subr.mxu0 0.0
    %172 = vmatpush1.msra.mxu0 0.0
    %173 = vmatprep.subr.mxu0 0.0
    %174 = vmatpush1.msra.mxu0 0.0
    %175 = vmatprep.subr.mxu0 0.0
    %176 = vmatpush1.msra.mxu0 0.0
    %177 = vmatprep.subr.mxu0 0.0
    %178 = vmatpush1.msra.mxu0 0.0
    %179 = vmatprep.subr.mxu0 0.0
    %180 = vmatpush1.msra.mxu0 0.0
    %181 = vmatprep.subr.mxu0 0.0
    %182 = vmatpush1.msra.mxu0 0.0
    %183 = vmatprep.subr.mxu0 0.0
    %184 = vmatpush1.msra.mxu0 0.0
    %185 = vmatprep.subr.mxu0 0.0
    %186 = vmatpush1.msra.mxu0 0.0
    %187 = vmatprep.subr.mxu0 0.0
    %188 = vmatpush1.msra.mxu0 0.0
    %189 = vmatprep.subr.mxu0 0.0
    %190 = vmatpush1.msra.mxu0 0.0
    %191 = vmatprep.subr.mxu0 0.0
    %192 = vmatpush1.msra.mxu0 0.0
    %193 = vmatprep.subr.mxu0 0.0
    %194 = vmatpush1.msra.mxu0 0.0
    %195 = vmatprep.subr.mxu0 0.0
    %196 = vmatpush1.msra.mxu0 0.0
    %197 = vmatprep.mubr.f32.mxu0 0.0
    %198 = vmatmul.mubr.f32.gmra.mrb[0].mxu0 %v131
    %v199 = vpop.f32.mrb[0].mxu0
    %v200 = vadd.f32 0.0, %v199
    %v201 = vpop.f32.mrb[0].mxu0
    %202 = vdwg.mxu0
    %203 = vmatprep.subr.mxu0 0.0
    %204 = vmatpush1.msra.mxu0 %v124
    %205 = vmatprep.subr.mxu0 0.0
    %206 = vmatpush1.msra.mxu0 0.0
    %207 = vmatprep.subr.mxu0 0.0
    %208 = vmatpush1.msra.mxu0 0.0
    %209 = vmatprep.subr.mxu0 0.0
    %210 = vmatpush1.msra.mxu0 0.0
    %211 = vmatprep.subr.mxu0 0.0
    %212 = vmatpush1.msra.mxu0 0.0
    %213 = vmatprep.subr.mxu0 0.0
    %214 = vmatpush1.msra.mxu0 0.0
    %215 = vmatprep.subr.mxu0 0.0
    %216 = vmatpush1.msra.mxu0 0.0
    %217 = vmatprep.subr.mxu0 0.0
    %218 = vmatpush1.msra.mxu0 0.0
    %219 = vmatprep.subr.mxu0 0.0
    %220 = vmatpush1.msra.mxu0 0.0
    %221 = vmatprep.subr.mxu0 0.0
    %222 = vmatpush1.msra.mxu0 0.0
    %223 = vmatprep.subr.mxu0 0.0
    %224 = vmatpush1.msra.mxu0 0.0
    %225 = vmatprep.subr.mxu0 0.0
    %226 = vmatpush1.msra.mxu0 0.0
    %227 = vmatprep.subr.mxu0 0.0
    %228 = vmatpush1.msra.mxu0 0.0
    %229 = vmatprep.subr.mxu0 0.0
    %230 = vmatpush1.msra.mxu0 0.0
    %231 = vmatprep.subr.mxu0 0.0
    %232 = vmatpush1.msra.mxu0 0.0
    %233 = vmatprep.subr.mxu0 0.0
    %234 = vmatpush1.msra.mxu0 0.0
    %235 = vmatprep.subr.mxu0 0.0
    %236 = vmatpush1.msra.mxu0 0.0
    %237 = vmatprep.subr.mxu0 0.0
    %238 = vmatpush1.msra.mxu0 0.0
    %239 = vmatprep.subr.mxu0 0.0
    %240 = vmatpush1.msra.mxu0 0.0
    %241 = vmatprep.subr.mxu0 0.0
    %242 = vmatpush1.msra.mxu0 0.0
    %243 = vmatprep.subr.mxu0 0.0
    %244 = vmatpush1.msra.mxu0 0.0
    %245 = vmatprep.subr.mxu0 0.0
    %246 = vmatpush1.msra.mxu0 0.0
    %247 = vmatprep.subr.mxu0 0.0
    %248 = vmatpush1.msra.mxu0 0.0
    %249 = vmatprep.subr.mxu0 0.0
    %250 = vmatpush1.msra.mxu0 0.0
    %251 = vmatprep.subr.mxu0 0.0
    %252 = vmatpush1.msra.mxu0 0.0
    %253 = vmatprep.subr.mxu0 0.0
    %254 = vmatpush1.msra.mxu0 0.0
    %255 = vmatprep.subr.mxu0 0.0
    %256 = vmatpush1.msra.mxu0 0.0
    %257 = vmatprep.subr.mxu0 0.0
    %258 = vmatpush1.msra.mxu0 0.0
    %259 = vmatprep.subr.mxu0 0.0
    %260 = vmatpush1.msra.mxu0 0.0
    %261 = vmatprep.subr.mxu0 0.0
    %262 = vmatpush1.msra.mxu0 0.0
    %263 = vmatprep.subr.mxu0 0.0
    %264 = vmatpush1.msra.mxu0 0.0
    %265 = vmatprep.subr.mxu0 0.0
    %266 = vmatpush1.msra.mxu0 0.0
    %267 = vmatprep.mubr.f32.mxu0 0.0
    %268 = vmatmul.mubr.f32.gmra.mrb[0].mxu0 %v131
    %v269 = vpop.f32.mrb[0].mxu0
    %v270 = vadd.f32 0.0, %v269
    %v271 = vpop.f32.mrb[0].mxu0
    %272 = vdwg.mxu0
    %v273 = vmul.f32 %v200, 0.001953125
    %v274 = vmul.f32 %v270, 0.001953125
    %v275 = vmul.f32 %v273, %v273
    %v276 = vsub.f32 %v274, %v275
    %v277 = vmax.f32 %v276, 0.0
    %v278 = vadd.f32 %v277, 1e-05
    %v279 = vrsqrt.pop %v278
    %v281 = vsel %vm37, %v127, 0
    %v284 = vsel %vm41, %v273, 0
    %286 = vmatprep.subr.mxu0 0.0
    %287 = vmatpush1.msra.mxu0 %v284
    %288 = vmatprep.subr.mxu0 0.0
    %289 = vmatpush1.msra.mxu0 0.0
    %290 = vmatprep.subr.mxu0 0.0
    %291 = vmatpush1.msra.mxu0 0.0
    %292 = vmatprep.subr.mxu0 0.0
    %293 = vmatpush1.msra.mxu0 0.0
    %294 = vmatprep.subr.mxu0 0.0
    %295 = vmatpush1.msra.mxu0 0.0
    %296 = vmatprep.subr.mxu0 0.0
    %297 = vmatpush1.msra.mxu0 0.0
    %298 = vmatprep.subr.mxu0 0.0
    %299 = vmatpush1.msra.mxu0 0.0
    %300 = vmatprep.subr.mxu0 0.0
    %301 = vmatpush1.msra.mxu0 0.0
    %302 = vmatprep.subr.mxu0 0.0
    %303 = vmatpush1.msra.mxu0 0.0
    %304 = vmatprep.subr.mxu0 0.0
    %305 = vmatpush1.msra.mxu0 0.0
    %306 = vmatprep.subr.mxu0 0.0
    %307 = vmatpush1.msra.mxu0 0.0
    %308 = vmatprep.subr.mxu0 0.0
    %309 = vmatpush1.msra.mxu0 0.0
    %310 = vmatprep.subr.mxu0 0.0
    %311 = vmatpush1.msra.mxu0 0.0
    %312 = vmatprep.subr.mxu0 0.0
    %313 = vmatpush1.msra.mxu0 0.0
    %314 = vmatprep.subr.mxu0 0.0
    %315 = vmatpush1.msra.mxu0 0.0
    %316 = vmatprep.subr.mxu0 0.0
    %317 = vmatpush1.msra.mxu0 0.0
    %318 = vmatprep.subr.mxu0 0.0
    %319 = vmatpush1.msra.mxu0 0.0
    %320 = vmatprep.subr.mxu0 0.0
    %321 = vmatpush1.msra.mxu0 0.0
    %322 = vmatprep.subr.mxu0 0.0
    %323 = vmatpush1.msra.mxu0 0.0
    %324 = vmatprep.subr.mxu0 0.0
    %325 = vmatpush1.msra.mxu0 0.0
    %326 = vmatprep.subr.mxu0 0.0
    %327 = vmatpush1.msra.mxu0 0.0
    %328 = vmatprep.subr.mxu0 0.0
    %329 = vmatpush1.msra.mxu0 0.0
    %330 = vmatprep.subr.mxu0 0.0
    %331 = vmatpush1.msra.mxu0 0.0
    %332 = vmatprep.subr.mxu0 0.0
    %333 = vmatpush1.msra.mxu0 0.0
    %334 = vmatprep.subr.mxu0 0.0
    %335 = vmatpush1.msra.mxu0 0.0
    %336 = vmatprep.subr.mxu0 0.0
    %337 = vmatpush1.msra.mxu0 0.0
    %338 = vmatprep.subr.mxu0 0.0
    %339 = vmatpush1.msra.mxu0 0.0
    %340 = vmatprep.subr.mxu0 0.0
    %341 = vmatpush1.msra.mxu0 0.0
    %342 = vmatprep.subr.mxu0 0.0
    %343 = vmatpush1.msra.mxu0 0.0
    %344 = vmatprep.subr.mxu0 0.0
    %345 = vmatpush1.msra.mxu0 0.0
    %346 = vmatprep.subr.mxu0 0.0
    %347 = vmatpush1.msra.mxu0 0.0
    %348 = vmatprep.subr.mxu0 0.0
    %349 = vmatpush1.msra.mxu0 0.0
    %350 = vmatprep.mubr.f32.mxu0 0.0
    %351 = vmatmul.mubr.f32.gmra.mrb[0].mxu0 %v281
    %v352 = vpop.f32.mrb[0].mxu0
    %v353 = vadd.f32 0.0, %v352
    %v354 = vpop.f32.mrb[0].mxu0
    %355 = vdwg.mxu0
    %v357 = vsel %vm41, %v279, 0
    %359 = vmatprep.subr.mxu0 0.0
    %360 = vmatpush1.msra.mxu0 %v357
    %361 = vmatprep.subr.mxu0 0.0
    %362 = vmatpush1.msra.mxu0 0.0
    %363 = vmatprep.subr.mxu0 0.0
    %364 = vmatpush1.msra.mxu0 0.0
    %365 = vmatprep.subr.mxu0 0.0
    %366 = vmatpush1.msra.mxu0 0.0
    %367 = vmatprep.subr.mxu0 0.0
    %368 = vmatpush1.msra.mxu0 0.0
    %369 = vmatprep.subr.mxu0 0.0
    %370 = vmatpush1.msra.mxu0 0.0
    %371 = vmatprep.subr.mxu0 0.0
    %372 = vmatpush1.msra.mxu0 0.0
    %373 = vmatprep.subr.mxu0 0.0
    %374 = vmatpush1.msra.mxu0 0.0
    %375 = vmatprep.subr.mxu0 0.0
    %376 = vmatpush1.msra.mxu0 0.0
    %377 = vmatprep.subr.mxu0 0.0
    %378 = vmatpush1.msra.mxu0 0.0
    %379 = vmatprep.subr.mxu0 0.0
    %380 = vmatpush1.msra.mxu0 0.0
    %381 = vmatprep.subr.mxu0 0.0
    %382 = vmatpush1.msra.mxu0 0.0
    %383 = vmatprep.subr.mxu0 0.0
    %384 = vmatpush1.msra.mxu0 0.0
    %385 = vmatprep.subr.mxu0 0.0
    %386 = vmatpush1.msra.mxu0 0.0
    %387 = vmatprep.subr.mxu0 0.0
    %388 = vmatpush1.msra.mxu0 0.0
    %389 = vmatprep.subr.mxu0 0.0
    %390 = vmatpush1.msra.mxu0 0.0
    %391 = vmatprep.subr.mxu0 0.0
    %392 = vmatpush1.msra.mxu0 0.0
    %393 = vmatprep.subr.mxu0 0.0
    %394 = vmatpush1.msra.mxu0 0.0
    %395 = vmatprep.subr.mxu0 0.0
    %396 = vmatpush1.msra.mxu0 0.0
    %397 = vmatprep.subr.mxu0 0.0
    %398 = vmatpush1.msra.mxu0 0.0
    %399 = vmatprep.subr.mxu0 0.0
    %400 = vmatpush1.msra.mxu0 0.0
    %401 = vmatprep.subr.mxu0 0.0
    %402 = vmatpush1.msra.mxu0 0.0
    %403 = vmatprep.subr.mxu0 0.0
    %404 = vmatpush1.msra.mxu0 0.0
    %405 = vmatprep.subr.mxu0 0.0
    %406 = vmatpush1.msra.mxu0 0.0
    %407 = vmatprep.subr.mxu0 0.0
    %408 = vmatpush1.msra.mxu0 0.0
    %409 = vmatprep.subr.mxu0 0.0
    %410 = vmatpush1.msra.mxu0 0.0
    %411 = vmatprep.subr.mxu0 0.0
    %412 = vmatpush1.msra.mxu0 0.0
    %413 = vmatprep.subr.mxu0 0.0
    %414 = vmatpush1.msra.mxu0 0.0
    %415 = vmatprep.subr.mxu0 0.0
    %416 = vmatpush1.msra.mxu0 0.0
    %417 = vmatprep.subr.mxu0 0.0
    %418 = vmatpush1.msra.mxu0 0.0
    %419 = vmatprep.subr.mxu0 0.0
    %420 = vmatpush1.msra.mxu0 0.0
    %421 = vmatprep.subr.mxu0 0.0
    %422 = vmatpush1.msra.mxu0 0.0
    %423 = vmatprep.mubr.f32.mxu0 0.0
    %424 = vmatmul.mubr.f32.gmra.mrb[0].mxu0 %v281
    %v425 = vpop.f32.mrb[0].mxu0
    %v426 = vadd.f32 0.0, %v425
    %v427 = vpop.f32.mrb[0].mxu0
    %428 = vdwg.mxu0
    %v429 = vmul.f32 %v426, %v125
    %v430 = vmul.f32 %v353, %v429
    %v431 = vsub.f32 %v126, %v430
    %433 = vset.pattern.permute.xlu0 0
    %434 = vperm.xlu0 %433, %v429
    %v435 = vpop.permute.xlu0 %434
    %v437 = vmul.f32 %v113, %v435
    %v438 = vmul.f32 %v115, %v435
    %440 = vset.pattern.permute.xlu0 0
    %441 = vperm.xlu0 %440, %v431
    %v442 = vpop.permute.xlu0 %441
    %v444 = vadd.f32 %v437, %v442
    %v445 = vadd.f32 %v438, %v442
    %446 = vst [vmem:[#allocation2] sm:$0xff] %v444
    %447 = vst [vmem:[#allocation2 + $0x8] sm:$0xff] %v445
    %s448 = scalar_lea.vmem %s0, 8
    %v449 = vld [vmem:[%s448] sm:$0xff]
    %v450 = vld [vmem:[%s1] sm:$0xff]
    %v451 = vld [vmem:[%s2] sm:$0xff]
    %453 = vset.pattern.permute.xlu0 0
    %454 = vperm.xlu0 %453, %v451
    %v455 = vpop.permute.xlu0 %454
    %v458 = vcombine.high %v449, %v449
    %v460 = vsel %vm37, %v450, 0
    %v462 = vsel %vm41, %v449, 0
    %v464 = vsel %vm41, %v458, 0
    %466 = vmatprep.subr.mxu0 %v464
    %467 = vmatpush1.msra.mxu0 %v462
    %468 = vmatprep.subr.mxu0 0.0
    %469 = vmatpush1.msra.mxu0 0.0
    %470 = vmatprep.subr.mxu0 0.0
    %471 = vmatpush1.msra.mxu0 0.0
    %472 = vmatprep.subr.mxu0 0.0
    %473 = vmatpush1.msra.mxu0 0.0
    %474 = vmatprep.subr.mxu0 0.0
    %475 = vmatpush1.msra.mxu0 0.0
    %476 = vmatprep.subr.mxu0 0.0
    %477 = vmatpush1.msra.mxu0 0.0
    %478 = vmatprep.subr.mxu0 0.0
    %479 = vmatpush1.msra.mxu0 0.0
    %480 = vmatprep.subr.mxu0 0.0
    %481 = vmatpush1.msra.mxu0 0.0
    %482 = vmatprep.subr.mxu0 0.0
    %483 = vmatpush1.msra.mxu0 0.0
    %484 = vmatprep.subr.mxu0 0.0
    %485 = vmatpush1.msra.mxu0 0.0
    %486 = vmatprep.subr.mxu0 0.0
    %487 = vmatpush1.msra.mxu0 0.0
    %488 = vmatprep.subr.mxu0 0.0
    %489 = vmatpush1.msra.mxu0 0.0
    %490 = vmatprep.subr.mxu0 0.0
    %491 = vmatpush1.msra.mxu0 0.0
    %492 = vmatprep.subr.mxu0 0.0
    %493 = vmatpush1.msra.mxu0 0.0
    %494 = vmatprep.subr.mxu0 0.0
    %495 = vmatpush1.msra.mxu0 0.0
    %496 = vmatprep.subr.mxu0 0.0
    %497 = vmatpush1.msra.mxu0 0.0
    %498 = vmatprep.subr.mxu0 0.0
    %499 = vmatpush1.msra.mxu0 0.0
    %500 = vmatprep.subr.mxu0 0.0
    %501 = vmatpush1.msra.mxu0 0.0
    %502 = vmatprep.subr.mxu0 0.0
    %503 = vmatpush1.msra.mxu0 0.0
    %504 = vmatprep.subr.mxu0 0.0
    %505 = vmatpush1.msra.mxu0 0.0
    %506 = vmatprep.subr.mxu0 0.0
    %507 = vmatpush1.msra.mxu0 0.0
    %508 = vmatprep.subr.mxu0 0.0
    %509 = vmatpush1.msra.mxu0 0.0
    %510 = vmatprep.subr.mxu0 0.0
    %511 = vmatpush1.msra.mxu0 0.0
    %512 = vmatprep.subr.mxu0 0.0
    %513 = vmatpush1.msra.mxu0 0.0
    %514 = vmatprep.subr.mxu0 0.0
    %515 = vmatpush1.msra.mxu0 0.0
    %516 = vmatprep.subr.mxu0 0.0
    %517 = vmatpush1.msra.mxu0 0.0
    %518 = vmatprep.subr.mxu0 0.0
    %519 = vmatpush1.msra.mxu0 0.0
    %520 = vmatprep.subr.mxu0 0.0
    %521 = vmatpush1.msra.mxu0 0.0
    %522 = vmatprep.subr.mxu0 0.0
    %523 = vmatpush1.msra.mxu0 0.0
    %524 = vmatprep.subr.mxu0 0.0
    %525 = vmatpush1.msra.mxu0 0.0
    %526 = vmatprep.subr.mxu0 0.0
    %527 = vmatpush1.msra.mxu0 0.0
    %528 = vmatprep.subr.mxu0 0.0
    %529 = vmatpush1.msra.mxu0 0.0
    %530 = vmatprep.mubr.f32.mxu0 0.0
    %531 = vmatmul.mubr.f32.gmra.mrb[0].mxu0 %v460
    %v532 = vpop.f32.mrb[0].mxu0
    %v533 = vadd.f32 %v455, %v532
    %v534 = vpop.f32.mrb[0].mxu0
    %v535 = vadd.f32 %v455, %v534
    %536 = vdwg.mxu0
    %v537 = vadd.f32 %v533, %v535
    %538 = vadd.xlane.f32.xlu0 %v537
    %v539 = vpop.xlane.xlu0 %538
    %v540 = vmul.f32 %v533, %v533
    %v541 = vmul.f32 %v535, %v535
    %v542 = vadd.f32 %v540, %v541
    %543 = vadd.xlane.f32.xlu0 %v542
    %v544 = vpop.xlane.xlu0 %543
    %v545 = vld [vmem:[%s3] sm:$0xff]
    %v546 = vld [vmem:[%s4] sm:$0xff]
    %v547 = vld [vmem:[%s5] sm:$0xff]
    %v548 = vld [vmem:[%s6] sm:$0xf]
    %v550 = vsel %vm129, %v548, 0
    %552 = vmatprep.subr.mxu0 0.0
    %553 = vmatpush1.msra.mxu0 %v539
    %554 = vmatprep.subr.mxu0 0.0
    %555 = vmatpush1.msra.mxu0 0.0
    %556 = vmatprep.subr.mxu0 0.0
    %557 = vmatpush1.msra.mxu0 0.0
    %558 = vmatprep.subr.mxu0 0.0
    %559 = vmatpush1.msra.mxu0 0.0
    %560 = vmatprep.subr.mxu0 0.0
    %561 = vmatpush1.msra.mxu0 0.0
    %562 = vmatprep.subr.mxu0 0.0
    %563 = vmatpush1.msra.mxu0 0.0
    %564 = vmatprep.subr.mxu0 0.0
    %565 = vmatpush1.msra.mxu0 0.0
    %566 = vmatprep.subr.mxu0 0.0
    %567 = vmatpush1.msra.mxu0 0.0
    %568 = vmatprep.subr.mxu0 0.0
    %569 = vmatpush1.msra.mxu0 0.0
    %570 = vmatprep.subr.mxu0 0.0
    %571 = vmatpush1.msra.mxu0 0.0
    %572 = vmatprep.subr.mxu0 0.0
    %573 = vmatpush1.msra.mxu0 0.0
    %574 = vmatprep.subr.mxu0 0.0
    %575 = vmatpush1.msra.mxu0 0.0
    %576 = vmatprep.subr.mxu0 0.0
    %577 = vmatpush1.msra.mxu0 0.0
    %578 = vmatprep.subr.mxu0 0.0
    %579 = vmatpush1.msra.mxu0 0.0
    %580 = vmatprep.subr.mxu0 0.0
    %581 = vmatpush1.msra.mxu0 0.0
    %582 = vmatprep.subr.mxu0 0.0
    %583 = vmatpush1.msra.mxu0 0.0
    %584 = vmatprep.subr.mxu0 0.0
    %585 = vmatpush1.msra.mxu0 0.0
    %586 = vmatprep.subr.mxu0 0.0
    %587 = vmatpush1.msra.mxu0 0.0
    %588 = vmatprep.subr.mxu0 0.0
    %589 = vmatpush1.msra.mxu0 0.0
    %590 = vmatprep.subr.mxu0 0.0
    %591 = vmatpush1.msra.mxu0 0.0
    %592 = vmatprep.subr.mxu0 0.0
    %593 = vmatpush1.msra.mxu0 0.0
    %594 = vmatprep.subr.mxu0 0.0
    %595 = vmatpush1.msra.mxu0 0.0
    %596 = vmatprep.subr.mxu0 0.0
    %597 = vmatpush1.msra.mxu0 0.0
    %598 = vmatprep.subr.mxu0 0.0
    %599 = vmatpush1.msra.mxu0 0.0
    %600 = vmatprep.subr.mxu0 0.0
    %601 = vmatpush1.msra.mxu0 0.0
    %602 = vmatprep.subr.mxu0 0.0
    %603 = vmatpush1.msra.mxu0 0.0
    %604 = vmatprep.subr.mxu0 0.0
    %605 = vmatpush1.msra.mxu0 0.0
    %606 = vmatprep.subr.mxu0 0.0
    %607 = vmatpush1.msra.mxu0 0.0
    %608 = vmatprep.subr.mxu0 0.0
    %609 = vmatpush1.msra.mxu0 0.0
    %610 = vmatprep.subr.mxu0 0.0
    %611 = vmatpush1.msra.mxu0 0.0
    %612 = vmatprep.subr.mxu0 0.0
    %613 = vmatpush1.msra.mxu0 0.0
    %614 = vmatprep.subr.mxu0 0.0
    %615 = vmatpush1.msra.mxu0 0.0
    %616 = vmatprep.mubr.f32.mxu0 0.0
    %617 = vmatmul.mubr.f32.gmra.mrb[0].mxu0 %v550
    %v618 = vpop.f32.mrb[0].mxu0
    %v619 = vadd.f32 0.0, %v618
    %v620 = vpop.f32.mrb[0].mxu0
    %621 = vdwg.mxu0
    %622 = vmatprep.subr.mxu0 0.0
    %623 = vmatpush1.msra.mxu0 %v544
    %624 = vmatprep.subr.mxu0 0.0
    %625 = vmatpush1.msra.mxu0 0.0
    %626 = vmatprep.subr.mxu0 0.0
    %627 = vmatpush1.msra.mxu0 0.0
    %628 = vmatprep.subr.mxu0 0.0
    %629 = vmatpush1.msra.mxu0 0.0
    %630 = vmatprep.subr.mxu0 0.0
    %631 = vmatpush1.msra.mxu0 0.0
    %632 = vmatprep.subr.mxu0 0.0
    %633 = vmatpush1.msra.mxu0 0.0
    %634 = vmatprep.subr.mxu0 0.0
    %635 = vmatpush1.msra.mxu0 0.0
    %636 = vmatprep.subr.mxu0 0.0
    %637 = vmatpush1.msra.mxu0 0.0
    %638 = vmatprep.subr.mxu0 0.0
    %639 = vmatpush1.msra.mxu0 0.0
    %640 = vmatprep.subr.mxu0 0.0
    %641 = vmatpush1.msra.mxu0 0.0
    %642 = vmatprep.subr.mxu0 0.0
    %643 = vmatpush1.msra.mxu0 0.0
    %644 = vmatprep.subr.mxu0 0.0
    %645 = vmatpush1.msra.mxu0 0.0
    %646 = vmatprep.subr.mxu0 0.0
    %647 = vmatpush1.msra.mxu0 0.0
    %648 = vmatprep.subr.mxu0 0.0
    %649 = vmatpush1.msra.mxu0 0.0
    %650 = vmatprep.subr.mxu0 0.0
    %651 = vmatpush1.msra.mxu0 0.0
    %652 = vmatprep.subr.mxu0 0.0
    %653 = vmatpush1.msra.mxu0 0.0
    %654 = vmatprep.subr.mxu0 0.0
    %655 = vmatpush1.msra.mxu0 0.0
    %656 = vmatprep.subr.mxu0 0.0
    %657 = vmatpush1.msra.mxu0 0.0
    %658 = vmatprep.subr.mxu0 0.0
    %659 = vmatpush1.msra.mxu0 0.0
    %660 = vmatprep.subr.mxu0 0.0
    %661 = vmatpush1.msra.mxu0 0.0
    %662 = vmatprep.subr.mxu0 0.0
    %663 = vmatpush1.msra.mxu0 0.0
    %664 = vmatprep.subr.mxu0 0.0
    %665 = vmatpush1.msra.mxu0 0.0
    %666 = vmatprep.subr.mxu0 0.0
    %667 = vmatpush1.msra.mxu0 0.0
    %668 = vmatprep.subr.mxu0 0.0
    %669 = vmatpush1.msra.mxu0 0.0
    %670 = vmatprep.subr.mxu0 0.0
    %671 = vmatpush1.msra.mxu0 0.0
    %672 = vmatprep.subr.mxu0 0.0
    %673 = vmatpush1.msra.mxu0 0.0
    %674 = vmatprep.subr.mxu0 0.0
    %675 = vmatpush1.msra.mxu0 0.0
    %676 = vmatprep.subr.mxu0 0.0
    %677 = vmatpush1.msra.mxu0 0.0
    %678 = vmatprep.subr.mxu0 0.0
    %679 = vmatpush1.msra.mxu0 0.0
    %680 = vmatprep.subr.mxu0 0.0
    %681 = vmatpush1.msra.mxu0 0.0
    %682 = vmatprep.subr.mxu0 0.0
    %683 = vmatpush1.msra.mxu0 0.0
    %684 = vmatprep.subr.mxu0 0.0
    %685 = vmatpush1.msra.mxu0 0.0
    %686 = vmatprep.mubr.f32.mxu0 0.0
    %687 = vmatmul.mubr.f32.gmra.mrb[0].mxu0 %v550
    %v688 = vpop.f32.mrb[0].mxu0
    %v689 = vadd.f32 0.0, %v688
    %v690 = vpop.f32.mrb[0].mxu0
    %691 = vdwg.mxu0
    %v692 = vmul.f32 %v619, 0.001953125
    %v693 = vmul.f32 %v689, 0.001953125
    %v694 = vmul.f32 %v692, %v692
    %v695 = vsub.f32 %v693, %v694
    %v696 = vmax.f32 %v695, 0.0
    %v697 = vadd.f32 %v696, 1e-05
    %v698 = vrsqrt.pop %v697
    %v700 = vsel %vm37, %v547, 0
    %v703 = vsel %vm41, %v692, 0
    %705 = vmatprep.subr.mxu0 0.0
    %706 = vmatpush1.msra.mxu0 %v703
    %707 = vmatprep.subr.mxu0 0.0
    %708 = vmatpush1.msra.mxu0 0.0
    %709 = vmatprep.subr.mxu0 0.0
    %710 = vmatpush1.msra.mxu0 0.0
    %711 = vmatprep.subr.mxu0 0.0
    %712 = vmatpush1.msra.mxu0 0.0
    %713 = vmatprep.subr.mxu0 0.0
    %714 = vmatpush1.msra.mxu0 0.0
    %715 = vmatprep.subr.mxu0 0.0
    %716 = vmatpush1.msra.mxu0 0.0
    %717 = vmatprep.subr.mxu0 0.0
    %718 = vmatpush1.msra.mxu0 0.0
    %719 = vmatprep.subr.mxu0 0.0
    %720 = vmatpush1.msra.mxu0 0.0
    %721 = vmatprep.subr.mxu0 0.0
    %722 = vmatpush1.msra.mxu0 0.0
    %723 = vmatprep.subr.mxu0 0.0
    %724 = vmatpush1.msra.mxu0 0.0
    %725 = vmatprep.subr.mxu0 0.0
    %726 = vmatpush1.msra.mxu0 0.0
    %727 = vmatprep.subr.mxu0 0.0
    %728 = vmatpush1.msra.mxu0 0.0
    %729 = vmatprep.subr.mxu0 0.0
    %730 = vmatpush1.msra.mxu0 0.0
    %731 = vmatprep.subr.mxu0 0.0
    %732 = vmatpush1.msra.mxu0 0.0
    %733 = vmatprep.subr.mxu0 0.0
    %734 = vmatpush1.msra.mxu0 0.0
    %735 = vmatprep.subr.mxu0 0.0
    %736 = vmatpush1.msra.mxu0 0.0
    %737 = vmatprep.subr.mxu0 0.0
    %738 = vmatpush1.msra.mxu0 0.0
    %739 = vmatprep.subr.mxu0 0.0
    %740 = vmatpush1.msra.mxu0 0.0
    %741 = vmatprep.subr.mxu0 0.0
    %742 = vmatpush1.msra.mxu0 0.0
    %743 = vmatprep.subr.mxu0 0.0
    %744 = vmatpush1.msra.mxu0 0.0
    %745 = vmatprep.subr.mxu0 0.0
    %746 = vmatpush1.msra.mxu0 0.0
    %747 = vmatprep.subr.mxu0 0.0
    %748 = vmatpush1.msra.mxu0 0.0
    %749 = vmatprep.subr.mxu0 0.0
    %750 = vmatpush1.msra.mxu0 0.0
    %751 = vmatprep.subr.mxu0 0.0
    %752 = vmatpush1.msra.mxu0 0.0
    %753 = vmatprep.subr.mxu0 0.0
    %754 = vmatpush1.msra.mxu0 0.0
    %755 = vmatprep.subr.mxu0 0.0
    %756 = vmatpush1.msra.mxu0 0.0
    %757 = vmatprep.subr.mxu0 0.0
    %758 = vmatpush1.msra.mxu0 0.0
    %759 = vmatprep.subr.mxu0 0.0
    %760 = vmatpush1.msra.mxu0 0.0
    %761 = vmatprep.subr.mxu0 0.0
    %762 = vmatpush1.msra.mxu0 0.0
    %763 = vmatprep.subr.mxu0 0.0
    %764 = vmatpush1.msra.mxu0 0.0
    %765 = vmatprep.subr.mxu0 0.0
    %766 = vmatpush1.msra.mxu0 0.0
    %767 = vmatprep.subr.mxu0 0.0
    %768 = vmatpush1.msra.mxu0 0.0
    %769 = vmatprep.mubr.f32.mxu0 0.0
    %770 = vmatmul.mubr.f32.gmra.mrb[0].mxu0 %v700
    %v771 = vpop.f32.mrb[0].mxu0
    %v772 = vadd.f32 0.0, %v771
    %v773 = vpop.f32.mrb[0].mxu0
    %774 = vdwg.mxu0
    %v776 = vsel %vm41, %v698, 0
    %778 = vmatprep.subr.mxu0 0.0
    %779 = vmatpush1.msra.mxu0 %v776
    %780 = vmatprep.subr.mxu0 0.0
    %781 = vmatpush1.msra.mxu0 0.0
    %782 = vmatprep.subr.mxu0 0.0
    %783 = vmatpush1.msra.mxu0 0.0
    %784 = vmatprep.subr.mxu0 0.0
    %785 = vmatpush1.msra.mxu0 0.0
    %786 = vmatprep.subr.mxu0 0.0
    %787 = vmatpush1.msra.mxu0 0.0
    %788 = vmatprep.subr.mxu0 0.0
    %789 = vmatpush1.msra.mxu0 0.0
    %790 = vmatprep.subr.mxu0 0.0
    %791 = vmatpush1.msra.mxu0 0.0
    %792 = vmatprep.subr.mxu0 0.0
    %793 = vmatpush1.msra.mxu0 0.0
    %794 = vmatprep.subr.mxu0 0.0
    %795 = vmatpush1.msra.mxu0 0.0
    %796 = vmatprep.subr.mxu0 0.0
    %797 = vmatpush1.msra.mxu0 0.0
    %798 = vmatprep.subr.mxu0 0.0
    %799 = vmatpush1.msra.mxu0 0.0
    %800 = vmatprep.subr.mxu0 0.0
    %801 = vmatpush1.msra.mxu0 0.0
    %802 = vmatprep.subr.mxu0 0.0
    %803 = vmatpush1.msra.mxu0 0.0
    %804 = vmatprep.subr.mxu0 0.0
    %805 = vmatpush1.msra.mxu0 0.0
    %806 = vmatprep.subr.mxu0 0.0
    %807 = vmatpush1.msra.mxu0 0.0
    %808 = vmatprep.subr.mxu0 0.0
    %809 = vmatpush1.msra.mxu0 0.0
    %810 = vmatprep.subr.mxu0 0.0
    %811 = vmatpush1.msra.mxu0 0.0
    %812 = vmatprep.subr.mxu0 0.0
    %813 = vmatpush1.msra.mxu0 0.0
    %814 = vmatprep.subr.mxu0 0.0
    %815 = vmatpush1.msra.mxu0 0.0
    %816 = vmatprep.subr.mxu0 0.0
    %817 = vmatpush1.msra.mxu0 0.0
    %818 = vmatprep.subr.mxu0 0.0
    %819 = vmatpush1.msra.mxu0 0.0
    %820 = vmatprep.subr.mxu0 0.0
    %821 = vmatpush1.msra.mxu0 0.0
    %822 = vmatprep.subr.mxu0 0.0
    %823 = vmatpush1.msra.mxu0 0.0
    %824 = vmatprep.subr.mxu0 0.0
    %825 = vmatpush1.msra.mxu0 0.0
    %826 = vmatprep.subr.mxu0 0.0
    %827 = vmatpush1.msra.mxu0 0.0
    %828 = vmatprep.subr.mxu0 0.0
    %829 = vmatpush1.msra.mxu0 0.0
    %830 = vmatprep.subr.mxu0 0.0
    %831 = vmatpush1.msra.mxu0 0.0
    %832 = vmatprep.subr.mxu0 0.0
    %833 = vmatpush1.msra.mxu0 0.0
    %834 = vmatprep.subr.mxu0 0.0
    %835 = vmatpush1.msra.mxu0 0.0
    %836 = vmatprep.subr.mxu0 0.0
    %837 = vmatpush1.msra.mxu0 0.0
    %838 = vmatprep.subr.mxu0 0.0
    %839 = vmatpush1.msra.mxu0 0.0
    %840 = vmatprep.subr.mxu0 0.0
    %841 = vmatpush1.msra.mxu0 0.0
    %842 = vmatprep.mubr.f32.mxu0 0.0
    %843 = vmatmul.mubr.f32.gmra.mrb[0].mxu0 %v700
    %v844 = vpop.f32.mrb[0].mxu0
    %v845 = vadd.f32 0.0, %v844
    %v846 = vpop.f32.mrb[0].mxu0
    %847 = vdwg.mxu0
    %v848 = vmul.f32 %v845, %v545
    %v849 = vmul.f32 %v772, %v848
    %v850 = vsub.f32 %v546, %v849
    %852 = vset.pattern.permute.xlu0 0
    %853 = vperm.xlu0 %852, %v848
    %v854 = vpop.permute.xlu0 %853
    %v856 = vmul.f32 %v533, %v854
    %v857 = vmul.f32 %v535, %v854
    %859 = vset.pattern.permute.xlu0 0
    %860 = vperm.xlu0 %859, %v850
    %v861 = vpop.permute.xlu0 %860
    %v863 = vadd.f32 %v856, %v861
    %v864 = vadd.f32 %v857, %v861
    %s865 = scalar_lea.vmem [#allocation2], 16
    %866 = vst [vmem:[%s865] sm:$0xff] %v863
    %867 = vst [vmem:[%s865 + $0x8] sm:$0xff] %v864
    // Predicated region
    $region30: #{tpu_custom_call.1} parent=1 // pred_check
      _
    $region31: #{tpu_custom_call.1} parent=1 // pred_check_branch
      %869 = sbr.rel (0) target = $region33
    $region32: #{tpu_custom_call.1} parent=1 // pred_region
      %s871 = ssub.s32 512, 512
      %872 = vsyncadd [#allocation3], %s871
      %s873 = sshll.u32 [#allocation2], 4
      %s874 = int_to_ptr.vmem [resolvable:$true] %s873
      %879 = dma.vmem_to_hbm [thread:$0]  %s874, 512, %s7, [#allocation3], 256, 256, 16
    $region33: #{tpu_custom_call.1} parent=1 // pred_fallthru
      _
    // Predicated region
    $region34: #{tpu_custom_call.1} parent=1 // pred_check
      _
    $region35: #{tpu_custom_call.1} parent=1 // pred_check_branch
      %881 = sbr.rel (0) target = $region37
    $region36: #{tpu_custom_call.1} parent=1 // pred_region
      %882 = dma.done [#allocation3], 512
    $region37: #{tpu_custom_call.1} parent=1 // pred_fallthru
      _
    %883 = vsyncpa [#allocation3], 1

</llo_original>
